<compile_context>
chip_gen: v5e
topology: v5e:2x2
jax: 0.10.0
libtpu: 0.0.40
codegen_flags: <defaults>
</compile_context>

<pallas_src>
import jax
import jax.numpy as jnp
from jax.experimental import pallas as pl
from jax.experimental.pallas import tpu as pltpu


def _value_net_kernel(xT_ref, w1_ref, b1_ref, w2_ref, b2_ref, w3_ref, b3_ref, o_ref):
    """One batch tile.  Activations kept transposed: (features, batch_tile).

    xT_ref: (D, bt) lane-dense input tile (batch on lanes).
    w*:     PyTorch (out, in) layout; b1/b2: (out, 1) f32; b3: (1, 1) f32 in SMEM.
    o_ref:  (1, bt) lane-dense output row.
    """
    xT = xT_ref[...]                                                      # (D, bt)

    # Layer 1: h1^T = W1 @ x^T  (plain NN matmul, f32 accumulation on the MXU).
    h1 = jnp.dot(w1_ref[...], xT, preferred_element_type=jnp.float32)    # (H, bt)
    h1 = jnp.maximum(h1 + b1_ref[...], 0.0)                              # f32 bias+ReLU

    # Layer 2: h2^T = W2 @ h1^T
    w2 = w2_ref[...]
    h2 = jnp.dot(w2, h1.astype(w2.dtype), preferred_element_type=jnp.float32)
    h2 = jnp.maximum(h2 + b2_ref[...], 0.0)                              # (H, bt)

    # Layer 3: out^T = W3 @ h2^T -> already the lane-dense (1, bt) output row.
    # (If the MXU slot ever binds, this 1-row matmul could become a VPU multiply +
    #  sublane reduce; low priority while the kernel is step/DMA bound.)
    w3 = w3_ref[...]                                                     # (1, H)
    o = jnp.dot(w3, h2.astype(w3.dtype), preferred_element_type=jnp.float32)
    o_ref[...] = (o + b3_ref[0, 0]).astype(o_ref.dtype)                  # b3: SMEM scalar


def _pick_tiling(B, batch_tile):
    """Pick a 128-aligned lane tile, balancing step-overhead amortization against
    padding waste, and keeping >=2 grid steps whenever possible (v7x has 2 TCs)."""
    bt_max = max(128, (batch_tile // 128) * 128)
    chunks = pl.cdiv(B, 128)                        # batch in 128-row lane chunks
    tiles_target = max(1, pl.cdiv(chunks * 128, bt_max))
    if tiles_target == 1 and chunks >= 2:
        tiles_target = 2                            # let v7x's 2nd TensorCore work
    best = None
    for cpt in {max(1, chunks // tiles_target), pl.cdiv(chunks, tiles_target)}:
        n = pl.cdiv(chunks, cpt)
        key = (cpt * n, n)                          # least padding, then fewest steps
        if best is None or key < best[0]:
            best = (key, cpt, n)
    _, cpt, num_tiles = best
    return 128 * cpt, num_tiles


def cast_params(params, dtype):
    """One-time weight cast (call once outside the step loop so per-call astype ops
    never show up next to such a small kernel).  Biases are left alone (f32 epilogue)."""
    out = dict(params)
    for k in ("w1", "w2", "w3"):
        out[k] = params[k].astype(dtype)
    return out


def value_network_forward(x, params, *, batch_tile=1024, compute_dtype=None):
    """x: (B, input_dim).  params: PyTorch layout w:(out,in), b:(out,1).

    compute_dtype: matmul-operand dtype (e.g. jnp.bfloat16).  The MXU is bf16-native
    on every generation INCLUDING v5e; the bias+ReLU epilogue always stays f32.
    For steady-state use, pre-cast weights once with cast_params() and leave
    compute_dtype=None (then only x is cast per call).
    """
    B, D = x.shape
    H = params["w1"].shape[0]
    bt, num_tiles = _pick_tiling(B, batch_tile)
    B_pad = bt * num_tiles

    w1, w2, w3 = params["w1"], params["w2"], params["w3"]
    cd = compute_dtype if compute_dtype is not None else w1.dtype
    w1, w2, w3 = tuple(w if w.dtype == cd else w.astype(cd) for w in (w1, w2, w3))
    # Biases always applied in f32 (epilogue stays on the f32 VPU path everywhere).
    b1 = params["b1"].astype(jnp.float32)
    b2 = params["b2"].astype(jnp.float32)
    b3 = params["b3"].astype(jnp.float32).reshape(1, 1)

    # One-time layout transpose so x tiles are lane-dense (batch on lanes, features
    # on sublanes): a (D=32, bt) block uses 1/4 of the VMEM of a (bt, 32) block and
    # needs no in-kernel transpose.
    xT = jnp.transpose(x).astype(cd)
    if B_pad != B:
        xT = jnp.pad(xT, ((0, 0), (0, B_pad - B)))

    # Grid-invariant operands: single-buffer them once they are big enough to matter
    # (halves resident weight VMEM for large hidden_dim, e.g. under v7x's 64 MiB).
    weight_bytes = sum(int(w.size) * w.dtype.itemsize for w in (w1, w2, w3, b1, b2))
    if weight_bytes > (4 << 20):
        resident = lambda shape: pl.BlockSpec(shape, lambda i: (0, 0),
                                              pipeline_mode=pl.Buffered(1))
    else:
        resident = lambda shape: pl.BlockSpec(shape, lambda i: (0, 0))

    out = pl.pallas_call(
        _value_net_kernel,
        out_shape=jax.ShapeDtypeStruct((1, B_pad), jnp.float32),
        grid_spec=pltpu.PrefetchScalarGridSpec(
            num_scalar_prefetch=0,
            grid=(num_tiles,),
            in_specs=[
                pl.BlockSpec((D, bt), lambda i: (0, i)),            # xT tile (lane-dense)
                resident((H, D)),                                   # w1
                resident((H, 1)),                                   # b1
                resident((H, H)),                                   # w2
                resident((H, 1)),                                   # b2
                resident((1, H)),                                   # w3
                pl.BlockSpec(memory_space=pltpu.MemorySpace.SMEM),  # b3 scalar
            ],
            # Single lane-dense output row: block sublane dim (1) == full array dim,
            # so writes are unmasked and generation-agnostic.
            out_specs=pl.BlockSpec((1, bt), lambda i: (0, i)),
        ),
        compiler_params=pltpu.CompilerParams(
            dimension_semantics=("parallel",),
            # Above the 16/32 MiB scoped defaults, below v7x's 64 MiB physical VMEM.
            vmem_limit_bytes=48 * 1024 * 1024,
        ),
    )(xT, w1, b1, w2, b2, w3, b3)

    # (1, B_pad) row -> (B, 1); pure layout plumbing in the wrapper.
    return out.reshape(B_pad, 1)[:B]


def init_params(key, input_dim, hidden_dim):
    # Matches nn.init.uniform_(m.weight / m.bias, a=-0.001, b=0.001) for all layers.
    # Weights kept in PyTorch (out, in) layout; biases as (out, 1).
    ks = jax.random.split(key, 6)
    u = lambda k, shape: jax.random.uniform(k, shape, jnp.float32, -0.001, 0.001)
    return {
        "w1": u(ks[0], (hidden_dim, input_dim)),
        "b1": u(ks[1], (hidden_dim, 1)),
        "w2": u(ks[2], (hidden_dim, hidden_dim)),
        "b2": u(ks[3], (hidden_dim, 1)),
        "w3": u(ks[4], (1, hidden_dim)),
        "b3": u(ks[5], (1, 1)),
    }


def reference_forward(x, p):
    # Pure-JAX reference identical to the PyTorch forward: y = x @ W.T + b.
    h1 = jnp.maximum(x @ p["w1"].T + p["b1"][:, 0], 0.0)
    h2 = jnp.maximum(h1 @ p["w2"].T + p["b2"][:, 0], 0.0)
    return h2 @ p["w3"].T + p["b3"][:, 0]


if __name__ == "__main__":
    key = jax.random.PRNGKey(0)
    k_x, k_p = jax.random.split(key)

    batch, input_dim, hidden_dim = 8, 32, 256   # hidden_dim matches the module default
    x = jax.random.normal(k_x, (batch, input_dim), jnp.float32)
    params = init_params(k_p, input_dim, hidden_dim)

    out = value_network_forward(x, params)      # f32 path (bit-comparable to reference)
    out = jax.block_until_ready(out)

    ref = reference_forward(x, params)
    assert out.shape == (batch, 1)
    assert jnp.allclose(out, ref, atol=1e-5, rtol=1e-5)

    print("KERNEL_OK")
</pallas_src>

<mosaic_0001>
module attributes {stable_mosaic.version = 11 : i64} {
  func.func @_value_net_kernel(%arg0: i32, %arg1: memref<32x128xf32, #tpu.memory_space<vmem>>, %arg2: memref<256x32xf32, #tpu.memory_space<vmem>>, %arg3: memref<256x1xf32, #tpu.memory_space<vmem>>, %arg4: memref<256x256xf32, #tpu.memory_space<vmem>>, %arg5: memref<256x1xf32, #tpu.memory_space<vmem>>, %arg6: memref<1x256xf32, #tpu.memory_space<vmem>>, %arg7: memref<1x1xf32, #tpu.memory_space<smem>>, %arg8: memref<1x128xf32, #tpu.memory_space<vmem>>) attributes {dimension_semantics = [#tpu.dimension_semantics<parallel>], iteration_bounds = array<i64: 1>, scalar_prefetch = 0 : i64, scratch_operands = 0 : i64, tpu.core_type = #tpu.core_type<tc>, window_params = [{transform_indices = @transform_0, window_bounds = array<i64: 32, 128>}, {pipeline_mode = #tpu.pipeline_mode<synchronous>, transform_indices = @transform_1, window_bounds = array<i64: 256, 32>}, {pipeline_mode = #tpu.pipeline_mode<synchronous>, transform_indices = @transform_2, window_bounds = array<i64: 256, 1>}, {pipeline_mode = #tpu.pipeline_mode<synchronous>, transform_indices = @transform_3, window_bounds = array<i64: 256, 256>}, {pipeline_mode = #tpu.pipeline_mode<synchronous>, transform_indices = @transform_4, window_bounds = array<i64: 256, 1>}, {pipeline_mode = #tpu.pipeline_mode<synchronous>, transform_indices = @transform_5, window_bounds = array<i64: 1, 256>}, {transform_indices = @transform_6, window_bounds = array<i64: 1, 1>}, {transform_indices = @transform_7, window_bounds = array<i64: 1, 128>}]} {
    %c0 = arith.constant 0 : index
    %c0_0 = arith.constant 0 : index
    %0 = vector.load %arg1[%c0, %c0_0] : memref<32x128xf32, #tpu.memory_space<vmem>>, vector<32x128xf32>
    %c0_1 = arith.constant 0 : index
    %c0_2 = arith.constant 0 : index
    %1 = vector.load %arg2[%c0_1, %c0_2] : memref<256x32xf32, #tpu.memory_space<vmem>>, vector<256x32xf32>
    %cst = arith.constant dense<0.000000e+00> : vector<256x128xf32>
    %2 = tpu.matmul %1, %0, %cst {dimension_numbers = #tpu.dot_dimension_numbers<[1], [0], [0], [1], [0, 0, 1, 1], [], []>} : vector<256x32xf32>, vector<32x128xf32>, vector<256x128xf32> -> vector<256x128xf32>
    %c0_3 = arith.constant 0 : index
    %c0_4 = arith.constant 0 : index
    %3 = vector.load %arg3[%c0_3, %c0_4] : memref<256x1xf32, #tpu.memory_space<vmem>>, vector<256x1xf32>
    %4 = vector.broadcast %3 : vector<256x1xf32> to vector<256x128xf32>
    %5 = arith.addf %2, %4 : vector<256x128xf32>
    %cst_5 = arith.constant 0.000000e+00 : f32
    %6 = vector.broadcast %cst_5 : f32 to vector<256x128xf32>
    %7 = arith.maximumf %5, %6 : vector<256x128xf32>
    %c0_6 = arith.constant 0 : index
    %c0_7 = arith.constant 0 : index
    %8 = vector.load %arg4[%c0_6, %c0_7] : memref<256x256xf32, #tpu.memory_space<vmem>>, vector<256x256xf32>
    %cst_8 = arith.constant dense<0.000000e+00> : vector<256x128xf32>
    %9 = tpu.matmul %8, %7, %cst_8 {dimension_numbers = #tpu.dot_dimension_numbers<[1], [0], [0], [1], [0, 0, 1, 1], [], []>} : vector<256x256xf32>, vector<256x128xf32>, vector<256x128xf32> -> vector<256x128xf32>
    %c0_9 = arith.constant 0 : index
    %c0_10 = arith.constant 0 : index
    %10 = vector.load %arg5[%c0_9, %c0_10] : memref<256x1xf32, #tpu.memory_space<vmem>>, vector<256x1xf32>
    %11 = vector.broadcast %10 : vector<256x1xf32> to vector<256x128xf32>
    %12 = arith.addf %9, %11 : vector<256x128xf32>
    %cst_11 = arith.constant 0.000000e+00 : f32
    %13 = vector.broadcast %cst_11 : f32 to vector<256x128xf32>
    %14 = arith.maximumf %12, %13 : vector<256x128xf32>
    %c0_12 = arith.constant 0 : index
    %c0_13 = arith.constant 0 : index
    %15 = vector.load %arg6[%c0_12, %c0_13] : memref<1x256xf32, #tpu.memory_space<vmem>>, vector<1x256xf32>
    %cst_14 = arith.constant dense<0.000000e+00> : vector<1x128xf32>
    %16 = tpu.matmul %15, %14, %cst_14 {dimension_numbers = #tpu.dot_dimension_numbers<[1], [0], [0], [1], [0, 0, 1, 1], [], []>} : vector<1x256xf32>, vector<256x128xf32>, vector<1x128xf32> -> vector<1x128xf32>
    %c0_15 = arith.constant 0 : index
    %c0_16 = arith.constant 0 : index
    %17 = memref.load %arg7[%c0_15, %c0_16] : memref<1x1xf32, #tpu.memory_space<smem>>
    %18 = vector.broadcast %17 : f32 to vector<1x128xf32>
    %19 = arith.addf %16, %18 : vector<1x128xf32>
    %c0_17 = arith.constant 0 : index
    %c0_18 = arith.constant 0 : index
    %20 = vector.load %arg8[%c0_17, %c0_18] : memref<1x128xf32, #tpu.memory_space<vmem>>, vector<1x128xf32>
    tpu.vector_store %arg8[%c0_17, %c0_18], %19 {strides = array<i32>} : memref<1x128xf32, #tpu.memory_space<vmem>>, vector<1x128xf32>,
    return
  }
  func.func @transform_0(%arg0: i32) -> (i32, i32) {
    %c0_i32 = arith.constant 0 : i32
    %c0_i32_0 = arith.constant 0 : i32
    return %c0_i32, %arg0 : i32, i32
  }
  func.func @transform_1(%arg0: i32) -> (i32, i32) {
    %c0_i32 = arith.constant 0 : i32
    %c0_i32_0 = arith.constant 0 : i32
    %c0_i32_1 = arith.constant 0 : i32
    return %c0_i32, %c0_i32_0 : i32, i32
  }
  func.func @transform_2(%arg0: i32) -> (i32, i32) {
    %c0_i32 = arith.constant 0 : i32
    %c0_i32_0 = arith.constant 0 : i32
    %c0_i32_1 = arith.constant 0 : i32
    return %c0_i32, %c0_i32_0 : i32, i32
  }
  func.func @transform_3(%arg0: i32) -> (i32, i32) {
    %c0_i32 = arith.constant 0 : i32
    %c0_i32_0 = arith.constant 0 : i32
    %c0_i32_1 = arith.constant 0 : i32
    return %c0_i32, %c0_i32_0 : i32, i32
  }
  func.func @transform_4(%arg0: i32) -> (i32, i32) {
    %c0_i32 = arith.constant 0 : i32
    %c0_i32_0 = arith.constant 0 : i32
    %c0_i32_1 = arith.constant 0 : i32
    return %c0_i32, %c0_i32_0 : i32, i32
  }
  func.func @transform_5(%arg0: i32) -> (i32, i32) {
    %c0_i32 = arith.constant 0 : i32
    %c0_i32_0 = arith.constant 0 : i32
    %c0_i32_1 = arith.constant 0 : i32
    return %c0_i32, %c0_i32_0 : i32, i32
  }
  func.func @transform_6(%arg0: i32) -> (i32, i32) {
    %c0_i32 = arith.constant 0 : i32
    %c0_i32_0 = arith.constant 0 : i32
    %c0_i32_1 = arith.constant 0 : i32
    return %c0_i32, %c0_i32_0 : i32, i32
  }
  func.func @transform_7(%arg0: i32) -> (i32, i32) {
    %c0_i32 = arith.constant 0 : i32
    %c0_i32_0 = arith.constant 0 : i32
    return %c0_i32, %arg0 : i32, i32
  }
}

</mosaic_0001>

<llo_original>
// kernel: tpu_custom_call.1
$region0: #{tpu_custom_call.1}
  #allocation0 [shape = 'u32[]', space=smem, size = 0x4, offset = 0x4, fixed_abs, tag = 'smem constant byte address 0x4 - core index']
  #allocation1 [shape = 'u32[72,128]{1,0:T(1,128)}', space=vmem, size = 0x9000, scoped, tag = 'internal scratch']
  #allocation2 [shape = 'f32[1,1]{1,0:T(1,128)S(6)}', space=smem, size = 0x200, scoped, tag = 'scoped memory for tpu_custom_call.1']
  %s0 = inlined_call_operand.vmem [shape: f32[32,128], index: 0, kind: input, shape index: {}]
  %s1 = inlined_call_operand.vmem [shape: f32[256,32], index: 1, kind: input, shape index: {}]
  %s2 = inlined_call_operand.vmem [shape: f32[256,1], index: 2, kind: input, shape index: {}]
  %s3 = inlined_call_operand.vmem [shape: f32[256,256], index: 3, kind: input, shape index: {}]
  %s4 = inlined_call_operand.vmem [shape: f32[256,1], index: 4, kind: input, shape index: {}]
  %s5 = inlined_call_operand.vmem [shape: f32[1,256], index: 5, kind: input, shape index: {}]
  %s6 = inlined_call_operand.<no memory space> [shape: f32[1,1], index: 6, kind: input, shape index: {}]
  %s7 = inlined_call_operand.hbm [shape: f32[1,128], index: 7, kind: output, shape index: {}]
  %s8 = sld [smem:[#allocation0]]
  $region38: #{tpu_custom_call.1} parent=0
    _
  %s10 = ssub.s32 1, %s8
  %s11 = scalar_select 0, %s10, %s8
  %12 = sst [smem:[#allocation2]] %s6
  $region1: #{tpu_custom_call.1} parent=0
    #allocation3 [shape = 'u8[512]{0}', space=vmem, size = 0x400, scoped, tag = 'output window, operand 0, single buffered']
    #allocation4 [shape = 's32[1]{0}', space=sflag, size = 0x4, scoped, tag = 'scoped memory for tpu_custom_call.1']
    %13 = vsyncpa [#allocation4], 0
    // Predicated region
    $region2: #{tpu_custom_call.1} parent=1 // pred_check
      _
    $region3: #{tpu_custom_call.1} parent=1 // pred_check_branch
      %15 = sbr.rel (0) target = $region5
    $region4: #{tpu_custom_call.1} parent=1 // pred_region
      _
    $region5: #{tpu_custom_call.1} parent=1 // pred_fallthru
      _
    // Predicated region
    $region6: #{tpu_custom_call.1} parent=1 // pred_check
      _
    $region7: #{tpu_custom_call.1} parent=1 // pred_check_branch
      %17 = sbr.rel (0) target = $region9
    $region8: #{tpu_custom_call.1} parent=1 // pred_region
      _
    $region9: #{tpu_custom_call.1} parent=1 // pred_fallthru
      _
    // Predicated region
    $region10: #{tpu_custom_call.1} parent=1 // pred_check
      _
    $region11: #{tpu_custom_call.1} parent=1 // pred_check_branch
      %19 = sbr.rel (0) target = $region13
    $region12: #{tpu_custom_call.1} parent=1 // pred_region
      _
    $region13: #{tpu_custom_call.1} parent=1 // pred_fallthru
      _
    // Predicated region
    $region14: #{tpu_custom_call.1} parent=1 // pred_check
      _
    $region15: #{tpu_custom_call.1} parent=1 // pred_check_branch
      %21 = sbr.rel (0) target = $region17
    $region16: #{tpu_custom_call.1} parent=1 // pred_region
      _
    $region17: #{tpu_custom_call.1} parent=1 // pred_fallthru
      _
    // Predicated region
    $region18: #{tpu_custom_call.1} parent=1 // pred_check
      _
    $region19: #{tpu_custom_call.1} parent=1 // pred_check_branch
      %23 = sbr.rel (0) target = $region21
    $region20: #{tpu_custom_call.1} parent=1 // pred_region
      _
    $region21: #{tpu_custom_call.1} parent=1 // pred_fallthru
      _
    // Predicated region
    $region22: #{tpu_custom_call.1} parent=1 // pred_check
      _
    $region23: #{tpu_custom_call.1} parent=1 // pred_check_branch
      %25 = sbr.rel (0) target = $region25
    $region24: #{tpu_custom_call.1} parent=1 // pred_region
      _
    $region25: #{tpu_custom_call.1} parent=1 // pred_fallthru
      _
    // Predicated region
    $region26: #{tpu_custom_call.1} parent=1 // pred_check
      _
    $region27: #{tpu_custom_call.1} parent=1 // pred_check_branch
      %27 = sbr.rel (0) target = $region29
    $region28: #{tpu_custom_call.1} parent=1 // pred_region
      _
    $region29: #{tpu_custom_call.1} parent=1 // pred_fallthru
      _
    %v28 = vld [vmem:[%s0] sm:$0xff]
    %v29 = vld [vmem:[%s0 + $0x8] sm:$0xff]
    %v30 = vld [vmem:[%s0 + $0x10] sm:$0xff]
    %v31 = vld [vmem:[%s0 + $0x18] sm:$0xff]
    %v32 = vld [vmem:[%s1] sm:$0xff]
    %v33 = vld [vmem:[%s1 + $0x8] sm:$0xff]
    %v34 = vld [vmem:[%s1 + $0x10] sm:$0xff]
    %v35 = vld [vmem:[%s1 + $0x18] sm:$0xff]
    %v36 = vld [vmem:[%s1 + $0x20] sm:$0xff]
    %v37 = vld [vmem:[%s1 + $0x28] sm:$0xff]
    %v38 = vld [vmem:[%s1 + $0x30] sm:$0xff]
    %v39 = vld [vmem:[%s1 + $0x38] sm:$0xff]
    %v40 = vld [vmem:[%s1 + $0x40] sm:$0xff]
    %v41 = vld [vmem:[%s1 + $0x48] sm:$0xff]
    %v42 = vld [vmem:[%s1 + $0x50] sm:$0xff]
    %v43 = vld [vmem:[%s1 + $0x58] sm:$0xff]
    %v44 = vld [vmem:[%s1 + $0x60] sm:$0xff]
    %v45 = vld [vmem:[%s1 + $0x68] sm:$0xff]
    %v46 = vld [vmem:[%s1 + $0x70] sm:$0xff]
    %v47 = vld [vmem:[%s1 + $0x78] sm:$0xff]
    %v48 = vld [vmem:[%s1 + $0x80] sm:$0xff]
    %v49 = vld [vmem:[%s1 + $0x88] sm:$0xff]
    %v50 = vld [vmem:[%s1 + $0x90] sm:$0xff]
    %v51 = vld [vmem:[%s1 + $0x98] sm:$0xff]
    %v52 = vld [vmem:[%s1 + $0xa0] sm:$0xff]
    %v53 = vld [vmem:[%s1 + $0xa8] sm:$0xff]
    %v54 = vld [vmem:[%s1 + $0xb0] sm:$0xff]
    %v55 = vld [vmem:[%s1 + $0xb8] sm:$0xff]
    %v56 = vld [vmem:[%s1 + $0xc0] sm:$0xff]
    %v57 = vld [vmem:[%s1 + $0xc8] sm:$0xff]
    %v58 = vld [vmem:[%s1 + $0xd0] sm:$0xff]
    %v59 = vld [vmem:[%s1 + $0xd8] sm:$0xff]
    %v60 = vld [vmem:[%s1 + $0xe0] sm:$0xff]
    %v61 = vld [vmem:[%s1 + $0xe8] sm:$0xff]
    %v62 = vld [vmem:[%s1 + $0xf0] sm:$0xff]
    %v63 = vld [vmem:[%s1 + $0xf8] sm:$0xff]
    %v64 = vld [vmem:[%s2] sm:$0xff]
    %v65 = vld [vmem:[%s2 + $0x8] sm:$0xff]
    %v66 = vld [vmem:[%s2 + $0x10] sm:$0xff]
    %v67 = vld [vmem:[%s2 + $0x18] sm:$0xff]
    %v68 = vld [vmem:[%s2 + $0x20] sm:$0xff]
    %v69 = vld [vmem:[%s2 + $0x28] sm:$0xff]
    %v70 = vld [vmem:[%s2 + $0x30] sm:$0xff]
    %v71 = vld [vmem:[%s2 + $0x38] sm:$0xff]
    %v72 = vld [vmem:[%s2 + $0x40] sm:$0xff]
    %v73 = vld [vmem:[%s2 + $0x48] sm:$0xff]
    %v74 = vld [vmem:[%s2 + $0x50] sm:$0xff]
    %v75 = vld [vmem:[%s2 + $0x58] sm:$0xff]
    %v76 = vld [vmem:[%s2 + $0x60] sm:$0xff]
    %v77 = vld [vmem:[%s2 + $0x68] sm:$0xff]
    %v78 = vld [vmem:[%s2 + $0x70] sm:$0xff]
    %v79 = vld [vmem:[%s2 + $0x78] sm:$0xff]
    %v80 = vld [vmem:[%s2 + $0x80] sm:$0xff]
    %v81 = vld [vmem:[%s2 + $0x88] sm:$0xff]
    %v82 = vld [vmem:[%s2 + $0x90] sm:$0xff]
    %v83 = vld [vmem:[%s2 + $0x98] sm:$0xff]
    %v84 = vld [vmem:[%s2 + $0xa0] sm:$0xff]
    %v85 = vld [vmem:[%s2 + $0xa8] sm:$0xff]
    %v86 = vld [vmem:[%s2 + $0xb0] sm:$0xff]
    %v87 = vld [vmem:[%s2 + $0xb8] sm:$0xff]
    %v88 = vld [vmem:[%s2 + $0xc0] sm:$0xff]
    %v89 = vld [vmem:[%s2 + $0xc8] sm:$0xff]
    %v90 = vld [vmem:[%s2 + $0xd0] sm:$0xff]
    %v91 = vld [vmem:[%s2 + $0xd8] sm:$0xff]
    %v92 = vld [vmem:[%s2 + $0xe0] sm:$0xff]
    %v93 = vld [vmem:[%s2 + $0xe8] sm:$0xff]
    %v94 = vld [vmem:[%s2 + $0xf0] sm:$0xff]
    %v95 = vld [vmem:[%s2 + $0xf8] sm:$0xff]
    %97 = vset.pattern.permute.xlu0 0
    %98 = vperm.xlu0 %97, %v64
    %v99 = vpop.permute.xlu0 %98
    %102 = vset.pattern.permute.xlu0 0
    %103 = vperm.xlu0 %102, %v65
    %v104 = vpop.permute.xlu0 %103
    %107 = vset.pattern.permute.xlu0 0
    %108 = vperm.xlu0 %107, %v66
    %v109 = vpop.permute.xlu0 %108
    %112 = vset.pattern.permute.xlu0 0
    %113 = vperm.xlu0 %112, %v67
    %v114 = vpop.permute.xlu0 %113
    %117 = vset.pattern.permute.xlu0 0
    %118 = vperm.xlu0 %117, %v68
    %v119 = vpop.permute.xlu0 %118
    %122 = vset.pattern.permute.xlu0 0
    %123 = vperm.xlu0 %122, %v69
    %v124 = vpop.permute.xlu0 %123
    %127 = vset.pattern.permute.xlu0 0
    %128 = vperm.xlu0 %127, %v70
    %v129 = vpop.permute.xlu0 %128
    %132 = vset.pattern.permute.xlu0 0
    %133 = vperm.xlu0 %132, %v71
    %v134 = vpop.permute.xlu0 %133
    %137 = vset.pattern.permute.xlu0 0
    %138 = vperm.xlu0 %137, %v72
    %v139 = vpop.permute.xlu0 %138
    %142 = vset.pattern.permute.xlu0 0
    %143 = vperm.xlu0 %142, %v73
    %v144 = vpop.permute.xlu0 %143
    %147 = vset.pattern.permute.xlu0 0
    %148 = vperm.xlu0 %147, %v74
    %v149 = vpop.permute.xlu0 %148
    %152 = vset.pattern.permute.xlu0 0
    %153 = vperm.xlu0 %152, %v75
    %v154 = vpop.permute.xlu0 %153
    %157 = vset.pattern.permute.xlu0 0
    %158 = vperm.xlu0 %157, %v76
    %v159 = vpop.permute.xlu0 %158
    %162 = vset.pattern.permute.xlu0 0
    %163 = vperm.xlu0 %162, %v77
    %v164 = vpop.permute.xlu0 %163
    %167 = vset.pattern.permute.xlu0 0
    %168 = vperm.xlu0 %167, %v78
    %v169 = vpop.permute.xlu0 %168
    %172 = vset.pattern.permute.xlu0 0
    %173 = vperm.xlu0 %172, %v79
    %v174 = vpop.permute.xlu0 %173
    %177 = vset.pattern.permute.xlu0 0
    %178 = vperm.xlu0 %177, %v80
    %v179 = vpop.permute.xlu0 %178
    %182 = vset.pattern.permute.xlu0 0
    %183 = vperm.xlu0 %182, %v81
    %v184 = vpop.permute.xlu0 %183
    %187 = vset.pattern.permute.xlu0 0
    %188 = vperm.xlu0 %187, %v82
    %v189 = vpop.permute.xlu0 %188
    %192 = vset.pattern.permute.xlu0 0
    %193 = vperm.xlu0 %192, %v83
    %v194 = vpop.permute.xlu0 %193
    %197 = vset.pattern.permute.xlu0 0
    %198 = vperm.xlu0 %197, %v84
    %v199 = vpop.permute.xlu0 %198
    %202 = vset.pattern.permute.xlu0 0
    %203 = vperm.xlu0 %202, %v85
    %v204 = vpop.permute.xlu0 %203
    %207 = vset.pattern.permute.xlu0 0
    %208 = vperm.xlu0 %207, %v86
    %v209 = vpop.permute.xlu0 %208
    %212 = vset.pattern.permute.xlu0 0
    %213 = vperm.xlu0 %212, %v87
    %v214 = vpop.permute.xlu0 %213
    %217 = vset.pattern.permute.xlu0 0
    %218 = vperm.xlu0 %217, %v88
    %v219 = vpop.permute.xlu0 %218
    %222 = vset.pattern.permute.xlu0 0
    %223 = vperm.xlu0 %222, %v89
    %v224 = vpop.permute.xlu0 %223
    %227 = vset.pattern.permute.xlu0 0
    %228 = vperm.xlu0 %227, %v90
    %v229 = vpop.permute.xlu0 %228
    %232 = vset.pattern.permute.xlu0 0
    %233 = vperm.xlu0 %232, %v91
    %v234 = vpop.permute.xlu0 %233
    %237 = vset.pattern.permute.xlu0 0
    %238 = vperm.xlu0 %237, %v92
    %v239 = vpop.permute.xlu0 %238
    %242 = vset.pattern.permute.xlu0 0
    %243 = vperm.xlu0 %242, %v93
    %v244 = vpop.permute.xlu0 %243
    %247 = vset.pattern.permute.xlu0 0
    %248 = vperm.xlu0 %247, %v94
    %v249 = vpop.permute.xlu0 %248
    %252 = vset.pattern.permute.xlu0 0
    %253 = vperm.xlu0 %252, %v95
    %v254 = vpop.permute.xlu0 %253
    %vm256 = vcmask 261120
    %v258 = vsel %vm256, %v32, 0
    %v261 = vsel %vm256, %v33, 0
    %v264 = vsel %vm256, %v34, 0
    %v267 = vsel %vm256, %v35, 0
    %v270 = vsel %vm256, %v36, 0
    %v273 = vsel %vm256, %v37, 0
    %v276 = vsel %vm256, %v38, 0
    %v279 = vsel %vm256, %v39, 0
    %v282 = vsel %vm256, %v40, 0
    %v285 = vsel %vm256, %v41, 0
    %v288 = vsel %vm256, %v42, 0
    %v291 = vsel %vm256, %v43, 0
    %v294 = vsel %vm256, %v44, 0
    %v297 = vsel %vm256, %v45, 0
    %v300 = vsel %vm256, %v46, 0
    %v303 = vsel %vm256, %v47, 0
    %v306 = vsel %vm256, %v48, 0
    %v309 = vsel %vm256, %v49, 0
    %v312 = vsel %vm256, %v50, 0
    %v315 = vsel %vm256, %v51, 0
    %v318 = vsel %vm256, %v52, 0
    %v321 = vsel %vm256, %v53, 0
    %v324 = vsel %vm256, %v54, 0
    %v327 = vsel %vm256, %v55, 0
    %v330 = vsel %vm256, %v56, 0
    %v333 = vsel %vm256, %v57, 0
    %v336 = vsel %vm256, %v58, 0
    %v339 = vsel %vm256, %v59, 0
    %v342 = vsel %vm256, %v60, 0
    %v345 = vsel %vm256, %v61, 0
    %v348 = vsel %vm256, %v62, 0
    %v351 = vsel %vm256, %v63, 0
    %353 = vmatpush.msra.mxu0 0.0
    %354 = vmatpush.msra.mxu0 0.0
    %355 = vmatpush.msra.mxu0 0.0
    %356 = vmatpush.msra.mxu0 0.0
    %357 = vmatpush.msra.mxu0 0.0
    %358 = vmatpush.msra.mxu0 0.0
    %359 = vmatpush.msra.mxu0 0.0
    %360 = vmatpush.msra.mxu0 0.0
    %361 = vmatpush.msra.mxu0 0.0
    %362 = vmatpush.msra.mxu0 0.0
    %363 = vmatpush.msra.mxu0 0.0
    %364 = vmatpush.msra.mxu0 0.0
    %365 = vmatpush.msra.mxu0 %v31
    %366 = vmatpush.msra.mxu0 %v30
    %367 = vmatpush.msra.mxu0 %v29
    %368 = vmatpush.msra.mxu0 %v28
    %369 = vmatmul.f32.gmra.mxu0 %v258
    %v370 = vpop.f32.mrf.mxu0
    %v371 = vadd.f32 %v99, %v370
    %372 = vmatmul.f32.gmra.mxu0 %v261
    %v373 = vpop.f32.mrf.mxu0
    %v374 = vadd.f32 %v104, %v373
    %375 = vmatmul.f32.gmra.mxu0 %v264
    %v376 = vpop.f32.mrf.mxu0
    %v377 = vadd.f32 %v109, %v376
    %378 = vmatmul.f32.gmra.mxu0 %v267
    %v379 = vpop.f32.mrf.mxu0
    %v380 = vadd.f32 %v114, %v379
    %381 = vmatmul.f32.gmra.mxu0 %v270
    %v382 = vpop.f32.mrf.mxu0
    %v383 = vadd.f32 %v119, %v382
    %384 = vmatmul.f32.gmra.mxu0 %v273
    %v385 = vpop.f32.mrf.mxu0
    %v386 = vadd.f32 %v124, %v385
    %387 = vmatmul.f32.gmra.mxu0 %v276
    %v388 = vpop.f32.mrf.mxu0
    %v389 = vadd.f32 %v129, %v388
    %390 = vmatmul.f32.gmra.mxu0 %v279
    %v391 = vpop.f32.mrf.mxu0
    %v392 = vadd.f32 %v134, %v391
    %393 = vmatmul.f32.gmra.mxu0 %v282
    %v394 = vpop.f32.mrf.mxu0
    %v395 = vadd.f32 %v139, %v394
    %396 = vmatmul.f32.gmra.mxu0 %v285
    %v397 = vpop.f32.mrf.mxu0
    %v398 = vadd.f32 %v144, %v397
    %399 = vmatmul.f32.gmra.mxu0 %v288
    %v400 = vpop.f32.mrf.mxu0
    %v401 = vadd.f32 %v149, %v400
    %402 = vmatmul.f32.gmra.mxu0 %v291
    %v403 = vpop.f32.mrf.mxu0
    %v404 = vadd.f32 %v154, %v403
    %405 = vmatmul.f32.gmra.mxu0 %v294
    %v406 = vpop.f32.mrf.mxu0
    %v407 = vadd.f32 %v159, %v406
    %408 = vmatmul.f32.gmra.mxu0 %v297
    %v409 = vpop.f32.mrf.mxu0
    %v410 = vadd.f32 %v164, %v409
    %411 = vmatmul.f32.gmra.mxu0 %v300
    %v412 = vpop.f32.mrf.mxu0
    %v413 = vadd.f32 %v169, %v412
    %414 = vmatmul.f32.gmra.mxu0 %v303
    %v415 = vpop.f32.mrf.mxu0
    %v416 = vadd.f32 %v174, %v415
    %417 = vmatmul.f32.gmra.mxu0 %v306
    %v418 = vpop.f32.mrf.mxu0
    %v419 = vadd.f32 %v179, %v418
    %420 = vmatmul.f32.gmra.mxu0 %v309
    %v421 = vpop.f32.mrf.mxu0
    %v422 = vadd.f32 %v184, %v421
    %423 = vmatmul.f32.gmra.mxu0 %v312
    %v424 = vpop.f32.mrf.mxu0
    %v425 = vadd.f32 %v189, %v424
    %426 = vmatmul.f32.gmra.mxu0 %v315
    %v427 = vpop.f32.mrf.mxu0
    %v428 = vadd.f32 %v194, %v427
    %429 = vmatmul.f32.gmra.mxu0 %v318
    %v430 = vpop.f32.mrf.mxu0
    %v431 = vadd.f32 %v199, %v430
    %432 = vmatmul.f32.gmra.mxu0 %v321
    %v433 = vpop.f32.mrf.mxu0
    %v434 = vadd.f32 %v204, %v433
    %435 = vmatmul.f32.gmra.mxu0 %v324
    %v436 = vpop.f32.mrf.mxu0
    %v437 = vadd.f32 %v209, %v436
    %438 = vmatmul.f32.gmra.mxu0 %v327
    %v439 = vpop.f32.mrf.mxu0
    %v440 = vadd.f32 %v214, %v439
    %441 = vmatmul.f32.gmra.mxu0 %v330
    %v442 = vpop.f32.mrf.mxu0
    %v443 = vadd.f32 %v219, %v442
    %444 = vmatmul.f32.gmra.mxu0 %v333
    %v445 = vpop.f32.mrf.mxu0
    %v446 = vadd.f32 %v224, %v445
    %447 = vmatmul.f32.gmra.mxu0 %v336
    %v448 = vpop.f32.mrf.mxu0
    %v449 = vadd.f32 %v229, %v448
    %450 = vmatmul.f32.gmra.mxu0 %v339
    %v451 = vpop.f32.mrf.mxu0
    %v452 = vadd.f32 %v234, %v451
    %453 = vmatmul.f32.gmra.mxu0 %v342
    %v454 = vpop.f32.mrf.mxu0
    %v455 = vadd.f32 %v239, %v454
    %456 = vmatmul.f32.gmra.mxu0 %v345
    %v457 = vpop.f32.mrf.mxu0
    %v458 = vadd.f32 %v244, %v457
    %459 = vmatmul.f32.gmra.mxu0 %v348
    %v460 = vpop.f32.mrf.mxu0
    %v461 = vadd.f32 %v249, %v460
    %462 = vmatmul.f32.gmra.mxu0 %v351
    %v463 = vpop.f32.mrf.mxu0
    %v464 = vadd.f32 %v254, %v463
    %465 = vdwg.mxu0
    %v466 = vmax.f32 %v371, 0.0
    %v467 = vmax.f32 %v374, 0.0
    %v468 = vmax.f32 %v377, 0.0
    %v469 = vmax.f32 %v380, 0.0
    %v470 = vmax.f32 %v383, 0.0
    %v471 = vmax.f32 %v386, 0.0
    %v472 = vmax.f32 %v389, 0.0
    %v473 = vmax.f32 %v392, 0.0
    %v474 = vmax.f32 %v395, 0.0
    %v475 = vmax.f32 %v398, 0.0
    %v476 = vmax.f32 %v401, 0.0
    %v477 = vmax.f32 %v404, 0.0
    %v478 = vmax.f32 %v407, 0.0
    %v479 = vmax.f32 %v410, 0.0
    %v480 = vmax.f32 %v413, 0.0
    %v481 = vmax.f32 %v416, 0.0
    %v482 = vmax.f32 %v419, 0.0
    %v483 = vmax.f32 %v422, 0.0
    %v484 = vmax.f32 %v425, 0.0
    %v485 = vmax.f32 %v428, 0.0
    %v486 = vmax.f32 %v431, 0.0
    %v487 = vmax.f32 %v434, 0.0
    %v488 = vmax.f32 %v437, 0.0
    %v489 = vmax.f32 %v440, 0.0
    %v490 = vmax.f32 %v443, 0.0
    %v491 = vmax.f32 %v446, 0.0
    %v492 = vmax.f32 %v449, 0.0
    %v493 = vmax.f32 %v452, 0.0
    %v494 = vmax.f32 %v455, 0.0
    %v495 = vmax.f32 %v458, 0.0
    %v496 = vmax.f32 %v461, 0.0
    %v497 = vmax.f32 %v464, 0.0
    %v498 = vld [vmem:[%s3] sm:$0xff]
    %v499 = vld [vmem:[%s3 + $0x8] sm:$0xff]
    %v500 = vld [vmem:[%s3 + $0x10] sm:$0xff]
    %v501 = vld [vmem:[%s3 + $0x18] sm:$0xff]
    %v502 = vld [vmem:[%s3 + $0x20] sm:$0xff]
    %v503 = vld [vmem:[%s3 + $0x28] sm:$0xff]
    %v504 = vld [vmem:[%s3 + $0x30] sm:$0xff]
    %v505 = vld [vmem:[%s3 + $0x38] sm:$0xff]
    %v506 = vld [vmem:[%s3 + $0x40] sm:$0xff]
    %v507 = vld [vmem:[%s3 + $0x48] sm:$0xff]
    %v508 = vld [vmem:[%s3 + $0x50] sm:$0xff]
    %v509 = vld [vmem:[%s3 + $0x58] sm:$0xff]
    %v510 = vld [vmem:[%s3 + $0x60] sm:$0xff]
    %v511 = vld [vmem:[%s3 + $0x68] sm:$0xff]
    %v512 = vld [vmem:[%s3 + $0x70] sm:$0xff]
    %v513 = vld [vmem:[%s3 + $0x78] sm:$0xff]
    %v514 = vld [vmem:[%s3 + $0x80] sm:$0xff]
    %v515 = vld [vmem:[%s3 + $0x88] sm:$0xff]
    %v516 = vld [vmem:[%s3 + $0x90] sm:$0xff]
    %v517 = vld [vmem:[%s3 + $0x98] sm:$0xff]
    %v518 = vld [vmem:[%s3 + $0xa0] sm:$0xff]
    %v519 = vld [vmem:[%s3 + $0xa8] sm:$0xff]
    %v520 = vld [vmem:[%s3 + $0xb0] sm:$0xff]
    %v521 = vld [vmem:[%s3 + $0xb8] sm:$0xff]
    %v522 = vld [vmem:[%s3 + $0xc0] sm:$0xff]
    %v523 = vld [vmem:[%s3 + $0xc8] sm:$0xff]
    %v524 = vld [vmem:[%s3 + $0xd0] sm:$0xff]
    %v525 = vld [vmem:[%s3 + $0xd8] sm:$0xff]
    %v526 = vld [vmem:[%s3 + $0xe0] sm:$0xff]
    %v527 = vld [vmem:[%s3 + $0xe8] sm:$0xff]
    %v528 = vld [vmem:[%s3 + $0xf0] sm:$0xff]
    %v529 = vld [vmem:[%s3 + $0xf8] sm:$0xff]
    %v530 = vld [vmem:[%s3 + $0x100] sm:$0xff]
    %v531 = vld [vmem:[%s3 + $0x108] sm:$0xff]
    %v532 = vld [vmem:[%s3 + $0x110] sm:$0xff]
    %v533 = vld [vmem:[%s3 + $0x118] sm:$0xff]
    %v534 = vld [vmem:[%s3 + $0x120] sm:$0xff]
    %v535 = vld [vmem:[%s3 + $0x128] sm:$0xff]
    %v536 = vld [vmem:[%s3 + $0x130] sm:$0xff]
    %v537 = vld [vmem:[%s3 + $0x138] sm:$0xff]
    %v538 = vld [vmem:[%s3 + $0x140] sm:$0xff]
    %v539 = vld [vmem:[%s3 + $0x148] sm:$0xff]
    %v540 = vld [vmem:[%s3 + $0x150] sm:$0xff]
    %v541 = vld [vmem:[%s3 + $0x158] sm:$0xff]
    %v542 = vld [vmem:[%s3 + $0x160] sm:$0xff]
    %v543 = vld [vmem:[%s3 + $0x168] sm:$0xff]
    %v544 = vld [vmem:[%s3 + $0x170] sm:$0xff]
    %v545 = vld [vmem:[%s3 + $0x178] sm:$0xff]
    %v546 = vld [vmem:[%s3 + $0x180] sm:$0xff]
    %v547 = vld [vmem:[%s3 + $0x188] sm:$0xff]
    %v548 = vld [vmem:[%s3 + $0x190] sm:$0xff]
    %v549 = vld [vmem:[%s3 + $0x198] sm:$0xff]
    %v550 = vld [vmem:[%s3 + $0x1a0] sm:$0xff]
    %v551 = vld [vmem:[%s3 + $0x1a8] sm:$0xff]
    %v552 = vld [vmem:[%s3 + $0x1b0] sm:$0xff]
    %v553 = vld [vmem:[%s3 + $0x1b8] sm:$0xff]
    %v554 = vld [vmem:[%s3 + $0x1c0] sm:$0xff]
    %v555 = vld [vmem:[%s3 + $0x1c8] sm:$0xff]
    %v556 = vld [vmem:[%s3 + $0x1d0] sm:$0xff]
    %v557 = vld [vmem:[%s3 + $0x1d8] sm:$0xff]
    %v558 = vld [vmem:[%s3 + $0x1e0] sm:$0xff]
    %v559 = vld [vmem:[%s3 + $0x1e8] sm:$0xff]
    %v560 = vld [vmem:[%s3 + $0x1f0] sm:$0xff]
    %v561 = vld [vmem:[%s3 + $0x1f8] sm:$0xff]
    %v562 = vld [vmem:[%s4] sm:$0xff]
    %v563 = vld [vmem:[%s4 + $0x8] sm:$0xff]
    %v564 = vld [vmem:[%s4 + $0x10] sm:$0xff]
    %v565 = vld [vmem:[%s4 + $0x18] sm:$0xff]
    %v566 = vld [vmem:[%s4 + $0x20] sm:$0xff]
    %v567 = vld [vmem:[%s4 + $0x28] sm:$0xff]
    %v568 = vld [vmem:[%s4 + $0x30] sm:$0xff]
    %v569 = vld [vmem:[%s4 + $0x38] sm:$0xff]
    %v570 = vld [vmem:[%s4 + $0x40] sm:$0xff]
    %v571 = vld [vmem:[%s4 + $0x48] sm:$0xff]
    %v572 = vld [vmem:[%s4 + $0x50] sm:$0xff]
    %v573 = vld [vmem:[%s4 + $0x58] sm:$0xff]
    %v574 = vld [vmem:[%s4 + $0x60] sm:$0xff]
    %v575 = vld [vmem:[%s4 + $0x68] sm:$0xff]
    %v576 = vld [vmem:[%s4 + $0x70] sm:$0xff]
    %v577 = vld [vmem:[%s4 + $0x78] sm:$0xff]
    %v578 = vld [vmem:[%s4 + $0x80] sm:$0xff]
    %v579 = vld [vmem:[%s4 + $0x88] sm:$0xff]
    %v580 = vld [vmem:[%s4 + $0x90] sm:$0xff]
    %v581 = vld [vmem:[%s4 + $0x98] sm:$0xff]
    %v582 = vld [vmem:[%s4 + $0xa0] sm:$0xff]
    %v583 = vld [vmem:[%s4 + $0xa8] sm:$0xff]
    %v584 = vld [vmem:[%s4 + $0xb0] sm:$0xff]
    %v585 = vld [vmem:[%s4 + $0xb8] sm:$0xff]
    %v586 = vld [vmem:[%s4 + $0xc0] sm:$0xff]
    %v587 = vld [vmem:[%s4 + $0xc8] sm:$0xff]
    %v588 = vld [vmem:[%s4 + $0xd0] sm:$0xff]
    %v589 = vld [vmem:[%s4 + $0xd8] sm:$0xff]
    %v590 = vld [vmem:[%s4 + $0xe0] sm:$0xff]
    %v591 = vld [vmem:[%s4 + $0xe8] sm:$0xff]
    %v592 = vld [vmem:[%s4 + $0xf0] sm:$0xff]
    %v593 = vld [vmem:[%s4 + $0xf8] sm:$0xff]
    %595 = vset.pattern.permute.xlu0 0
    %596 = vperm.xlu0 %595, %v562
    %v597 = vpop.permute.xlu0 %596
    %600 = vset.pattern.permute.xlu0 0
    %601 = vperm.xlu0 %600, %v563
    %v602 = vpop.permute.xlu0 %601
    %605 = vset.pattern.permute.xlu0 0
    %606 = vperm.xlu0 %605, %v564
    %v607 = vpop.permute.xlu0 %606
    %610 = vset.pattern.permute.xlu0 0
    %611 = vperm.xlu0 %610, %v565
    %v612 = vpop.permute.xlu0 %611
    %615 = vset.pattern.permute.xlu0 0
    %616 = vperm.xlu0 %615, %v566
    %v617 = vpop.permute.xlu0 %616
    %620 = vset.pattern.permute.xlu0 0
    %621 = vperm.xlu0 %620, %v567
    %v622 = vpop.permute.xlu0 %621
    %625 = vset.pattern.permute.xlu0 0
    %626 = vperm.xlu0 %625, %v568
    %v627 = vpop.permute.xlu0 %626
    %630 = vset.pattern.permute.xlu0 0
    %631 = vperm.xlu0 %630, %v569
    %v632 = vpop.permute.xlu0 %631
    %635 = vset.pattern.permute.xlu0 0
    %636 = vperm.xlu0 %635, %v570
    %v637 = vpop.permute.xlu0 %636
    %640 = vset.pattern.permute.xlu0 0
    %641 = vperm.xlu0 %640, %v571
    %v642 = vpop.permute.xlu0 %641
    %645 = vset.pattern.permute.xlu0 0
    %646 = vperm.xlu0 %645, %v572
    %v647 = vpop.permute.xlu0 %646
    %650 = vset.pattern.permute.xlu0 0
    %651 = vperm.xlu0 %650, %v573
    %v652 = vpop.permute.xlu0 %651
    %655 = vset.pattern.permute.xlu0 0
    %656 = vperm.xlu0 %655, %v574
    %v657 = vpop.permute.xlu0 %656
    %660 = vset.pattern.permute.xlu0 0
    %661 = vperm.xlu0 %660, %v575
    %v662 = vpop.permute.xlu0 %661
    %665 = vset.pattern.permute.xlu0 0
    %666 = vperm.xlu0 %665, %v576
    %v667 = vpop.permute.xlu0 %666
    %670 = vset.pattern.permute.xlu0 0
    %671 = vperm.xlu0 %670, %v577
    %v672 = vpop.permute.xlu0 %671
    %675 = vset.pattern.permute.xlu0 0
    %676 = vperm.xlu0 %675, %v578
    %v677 = vpop.permute.xlu0 %676
    %680 = vset.pattern.permute.xlu0 0
    %681 = vperm.xlu0 %680, %v579
    %v682 = vpop.permute.xlu0 %681
    %685 = vset.pattern.permute.xlu0 0
    %686 = vperm.xlu0 %685, %v580
    %v687 = vpop.permute.xlu0 %686
    %690 = vset.pattern.permute.xlu0 0
    %691 = vperm.xlu0 %690, %v581
    %v692 = vpop.permute.xlu0 %691
    %695 = vset.pattern.permute.xlu0 0
    %696 = vperm.xlu0 %695, %v582
    %v697 = vpop.permute.xlu0 %696
    %700 = vset.pattern.permute.xlu0 0
    %701 = vperm.xlu0 %700, %v583
    %v702 = vpop.permute.xlu0 %701
    %705 = vset.pattern.permute.xlu0 0
    %706 = vperm.xlu0 %705, %v584
    %v707 = vpop.permute.xlu0 %706
    %710 = vset.pattern.permute.xlu0 0
    %711 = vperm.xlu0 %710, %v585
    %v712 = vpop.permute.xlu0 %711
    %715 = vset.pattern.permute.xlu0 0
    %716 = vperm.xlu0 %715, %v586
    %v717 = vpop.permute.xlu0 %716
    %720 = vset.pattern.permute.xlu0 0
    %721 = vperm.xlu0 %720, %v587
    %v722 = vpop.permute.xlu0 %721
    %725 = vset.pattern.permute.xlu0 0
    %726 = vperm.xlu0 %725, %v588
    %v727 = vpop.permute.xlu0 %726
    %730 = vset.pattern.permute.xlu0 0
    %731 = vperm.xlu0 %730, %v589
    %v732 = vpop.permute.xlu0 %731
    %735 = vset.pattern.permute.xlu0 0
    %736 = vperm.xlu0 %735, %v590
    %v737 = vpop.permute.xlu0 %736
    %740 = vset.pattern.permute.xlu0 0
    %741 = vperm.xlu0 %740, %v591
    %v742 = vpop.permute.xlu0 %741
    %745 = vset.pattern.permute.xlu0 0
    %746 = vperm.xlu0 %745, %v592
    %v747 = vpop.permute.xlu0 %746
    %750 = vset.pattern.permute.xlu0 0
    %751 = vperm.xlu0 %750, %v593
    %v752 = vpop.permute.xlu0 %751
    %754 = vmatpush.msra.mxu0 %v481
    %755 = vmatpush.msra.mxu0 %v480
    %756 = vmatpush.msra.mxu0 %v479
    %757 = vmatpush.msra.mxu0 %v478
    %758 = vmatpush.msra.mxu0 %v477
    %759 = vmatpush.msra.mxu0 %v476
    %760 = vmatpush.msra.mxu0 %v475
    %761 = vmatpush.msra.mxu0 %v474
    %762 = vmatpush.msra.mxu0 %v473
    %763 = vmatpush.msra.mxu0 %v472
    %764 = vmatpush.msra.mxu0 %v471
    %765 = vmatpush.msra.mxu0 %v470
    %766 = vmatpush.msra.mxu0 %v469
    %767 = vmatpush.msra.mxu0 %v468
    %768 = vmatpush.msra.mxu0 %v467
    %769 = vmatpush.msra.mxu0 %v466
    %770 = vmatmul.f32.gmra.mxu0 %v498
    %v771 = vpop.f32.mrf.mxu0
    %v772 = vadd.f32 %v597, %v771
    %773 = vmatmul.f32.gmra.mxu0 %v500
    %v774 = vpop.f32.mrf.mxu0
    %v775 = vadd.f32 %v602, %v774
    %776 = vmatmul.f32.gmra.mxu0 %v502
    %v777 = vpop.f32.mrf.mxu0
    %v778 = vadd.f32 %v607, %v777
    %779 = vmatmul.f32.gmra.mxu0 %v504
    %v780 = vpop.f32.mrf.mxu0
    %v781 = vadd.f32 %v612, %v780
    %782 = vmatmul.f32.gmra.mxu0 %v506
    %v783 = vpop.f32.mrf.mxu0
    %v784 = vadd.f32 %v617, %v783
    %785 = vmatmul.f32.gmra.mxu0 %v508
    %v786 = vpop.f32.mrf.mxu0
    %v787 = vadd.f32 %v622, %v786
    %788 = vmatmul.f32.gmra.mxu0 %v510
    %v789 = vpop.f32.mrf.mxu0
    %v790 = vadd.f32 %v627, %v789
    %791 = vmatmul.f32.gmra.mxu0 %v512
    %v792 = vpop.f32.mrf.mxu0
    %v793 = vadd.f32 %v632, %v792
    %794 = vmatmul.f32.gmra.mxu0 %v514
    %v795 = vpop.f32.mrf.mxu0
    %v796 = vadd.f32 %v637, %v795
    %797 = vmatmul.f32.gmra.mxu0 %v516
    %v798 = vpop.f32.mrf.mxu0
    %v799 = vadd.f32 %v642, %v798
    %800 = vmatmul.f32.gmra.mxu0 %v518
    %v801 = vpop.f32.mrf.mxu0
    %v802 = vadd.f32 %v647, %v801
    %803 = vmatmul.f32.gmra.mxu0 %v520
    %v804 = vpop.f32.mrf.mxu0
    %v805 = vadd.f32 %v652, %v804
    %806 = vmatmul.f32.gmra.mxu0 %v522
    %v807 = vpop.f32.mrf.mxu0
    %v808 = vadd.f32 %v657, %v807
    %809 = vmatmul.f32.gmra.mxu0 %v524
    %v810 = vpop.f32.mrf.mxu0
    %v811 = vadd.f32 %v662, %v810
    %812 = vmatmul.f32.gmra.mxu0 %v526
    %v813 = vpop.f32.mrf.mxu0
    %v814 = vadd.f32 %v667, %v813
    %815 = vmatmul.f32.gmra.mxu0 %v528
    %v816 = vpop.f32.mrf.mxu0
    %v817 = vadd.f32 %v672, %v816
    %818 = vmatmul.f32.gmra.mxu0 %v530
    %v819 = vpop.f32.mrf.mxu0
    %v820 = vadd.f32 %v677, %v819
    %821 = vmatmul.f32.gmra.mxu0 %v532
    %v822 = vpop.f32.mrf.mxu0
    %v823 = vadd.f32 %v682, %v822
    %824 = vmatmul.f32.gmra.mxu0 %v534
    %v825 = vpop.f32.mrf.mxu0
    %v826 = vadd.f32 %v687, %v825
    %827 = vmatmul.f32.gmra.mxu0 %v536
    %v828 = vpop.f32.mrf.mxu0
    %v829 = vadd.f32 %v692, %v828
    %830 = vmatmul.f32.gmra.mxu0 %v538
    %v831 = vpop.f32.mrf.mxu0
    %v832 = vadd.f32 %v697, %v831
    %833 = vmatmul.f32.gmra.mxu0 %v540
    %v834 = vpop.f32.mrf.mxu0
    %v835 = vadd.f32 %v702, %v834
    %836 = vmatmul.f32.gmra.mxu0 %v542
    %v837 = vpop.f32.mrf.mxu0
    %v838 = vadd.f32 %v707, %v837
    %839 = vmatmul.f32.gmra.mxu0 %v544
    %v840 = vpop.f32.mrf.mxu0
    %v841 = vadd.f32 %v712, %v840
    %842 = vmatmul.f32.gmra.mxu0 %v546
    %v843 = vpop.f32.mrf.mxu0
    %v844 = vadd.f32 %v717, %v843
    %845 = vmatmul.f32.gmra.mxu0 %v548
    %v846 = vpop.f32.mrf.mxu0
    %v847 = vadd.f32 %v722, %v846
    %848 = vmatmul.f32.gmra.mxu0 %v550
    %v849 = vpop.f32.mrf.mxu0
    %v850 = vadd.f32 %v727, %v849
    %851 = vmatmul.f32.gmra.mxu0 %v552
    %v852 = vpop.f32.mrf.mxu0
    %v853 = vadd.f32 %v732, %v852
    %854 = vmatmul.f32.gmra.mxu0 %v554
    %v855 = vpop.f32.mrf.mxu0
    %v856 = vadd.f32 %v737, %v855
    %857 = vmatmul.f32.gmra.mxu0 %v556
    %v858 = vpop.f32.mrf.mxu0
    %v859 = vadd.f32 %v742, %v858
    %860 = vmatmul.f32.gmra.mxu0 %v558
    %v861 = vpop.f32.mrf.mxu0
    %v862 = vadd.f32 %v747, %v861
    %863 = vmatmul.f32.gmra.mxu0 %v560
    %v864 = vpop.f32.mrf.mxu0
    %v865 = vadd.f32 %v752, %v864
    %866 = vdwg.mxu0
    %867 = vmatpush.msra.mxu0 %v497
    %868 = vmatpush.msra.mxu0 %v496
    %869 = vmatpush.msra.mxu0 %v495
    %870 = vmatpush.msra.mxu0 %v494
    %871 = vmatpush.msra.mxu0 %v493
    %872 = vmatpush.msra.mxu0 %v492
    %873 = vmatpush.msra.mxu0 %v491
    %874 = vmatpush.msra.mxu0 %v490
    %875 = vmatpush.msra.mxu0 %v489
    %876 = vmatpush.msra.mxu0 %v488
    %877 = vmatpush.msra.mxu0 %v487
    %878 = vmatpush.msra.mxu0 %v486
    %879 = vmatpush.msra.mxu0 %v485
    %880 = vmatpush.msra.mxu0 %v484
    %881 = vmatpush.msra.mxu0 %v483
    %882 = vmatpush.msra.mxu0 %v482
    %883 = vmatmul.f32.gmra.mxu0 %v499
    %v884 = vpop.f32.mrf.mxu0
    %v885 = vadd.f32 %v772, %v884
    %886 = vmatmul.f32.gmra.mxu0 %v501
    %v887 = vpop.f32.mrf.mxu0
    %v888 = vadd.f32 %v775, %v887
    %889 = vmatmul.f32.gmra.mxu0 %v503
    %v890 = vpop.f32.mrf.mxu0
    %v891 = vadd.f32 %v778, %v890
    %892 = vmatmul.f32.gmra.mxu0 %v505
    %v893 = vpop.f32.mrf.mxu0
    %v894 = vadd.f32 %v781, %v893
    %895 = vmatmul.f32.gmra.mxu0 %v507
    %v896 = vpop.f32.mrf.mxu0
    %v897 = vadd.f32 %v784, %v896
    %898 = vmatmul.f32.gmra.mxu0 %v509
    %v899 = vpop.f32.mrf.mxu0
    %v900 = vadd.f32 %v787, %v899
    %901 = vmatmul.f32.gmra.mxu0 %v511
    %v902 = vpop.f32.mrf.mxu0
    %v903 = vadd.f32 %v790, %v902
    %904 = vmatmul.f32.gmra.mxu0 %v513
    %v905 = vpop.f32.mrf.mxu0
    %v906 = vadd.f32 %v793, %v905
    %907 = vmatmul.f32.gmra.mxu0 %v515
    %v908 = vpop.f32.mrf.mxu0
    %v909 = vadd.f32 %v796, %v908
    %910 = vmatmul.f32.gmra.mxu0 %v517
    %v911 = vpop.f32.mrf.mxu0
    %v912 = vadd.f32 %v799, %v911
    %913 = vmatmul.f32.gmra.mxu0 %v519
    %v914 = vpop.f32.mrf.mxu0
    %v915 = vadd.f32 %v802, %v914
    %916 = vmatmul.f32.gmra.mxu0 %v521
    %v917 = vpop.f32.mrf.mxu0
    %v918 = vadd.f32 %v805, %v917
    %919 = vmatmul.f32.gmra.mxu0 %v523
    %v920 = vpop.f32.mrf.mxu0
    %v921 = vadd.f32 %v808, %v920
    %922 = vmatmul.f32.gmra.mxu0 %v525
    %v923 = vpop.f32.mrf.mxu0
    %v924 = vadd.f32 %v811, %v923
    %925 = vmatmul.f32.gmra.mxu0 %v527
    %v926 = vpop.f32.mrf.mxu0
    %v927 = vadd.f32 %v814, %v926
    %928 = vmatmul.f32.gmra.mxu0 %v529
    %v929 = vpop.f32.mrf.mxu0
    %v930 = vadd.f32 %v817, %v929
    %931 = vmatmul.f32.gmra.mxu0 %v531
    %v932 = vpop.f32.mrf.mxu0
    %v933 = vadd.f32 %v820, %v932
    %934 = vmatmul.f32.gmra.mxu0 %v533
    %v935 = vpop.f32.mrf.mxu0
    %v936 = vadd.f32 %v823, %v935
    %937 = vmatmul.f32.gmra.mxu0 %v535
    %v938 = vpop.f32.mrf.mxu0
    %v939 = vadd.f32 %v826, %v938
    %940 = vmatmul.f32.gmra.mxu0 %v537
    %v941 = vpop.f32.mrf.mxu0
    %v942 = vadd.f32 %v829, %v941
    %943 = vmatmul.f32.gmra.mxu0 %v539
    %v944 = vpop.f32.mrf.mxu0
    %v945 = vadd.f32 %v832, %v944
    %946 = vmatmul.f32.gmra.mxu0 %v541
    %v947 = vpop.f32.mrf.mxu0
    %v948 = vadd.f32 %v835, %v947
    %949 = vmatmul.f32.gmra.mxu0 %v543
    %v950 = vpop.f32.mrf.mxu0
    %v951 = vadd.f32 %v838, %v950
    %952 = vmatmul.f32.gmra.mxu0 %v545
    %v953 = vpop.f32.mrf.mxu0
    %v954 = vadd.f32 %v841, %v953
    %955 = vmatmul.f32.gmra.mxu0 %v547
    %v956 = vpop.f32.mrf.mxu0
    %v957 = vadd.f32 %v844, %v956
    %958 = vmatmul.f32.gmra.mxu0 %v549
    %v959 = vpop.f32.mrf.mxu0
    %v960 = vadd.f32 %v847, %v959
    %961 = vmatmul.f32.gmra.mxu0 %v551
    %v962 = vpop.f32.mrf.mxu0
    %v963 = vadd.f32 %v850, %v962
    %964 = vmatmul.f32.gmra.mxu0 %v553
    %v965 = vpop.f32.mrf.mxu0
    %v966 = vadd.f32 %v853, %v965
    %967 = vmatmul.f32.gmra.mxu0 %v555
    %v968 = vpop.f32.mrf.mxu0
    %v969 = vadd.f32 %v856, %v968
    %970 = vmatmul.f32.gmra.mxu0 %v557
    %v971 = vpop.f32.mrf.mxu0
    %v972 = vadd.f32 %v859, %v971
    %973 = vmatmul.f32.gmra.mxu0 %v559
    %v974 = vpop.f32.mrf.mxu0
    %v975 = vadd.f32 %v862, %v974
    %976 = vmatmul.f32.gmra.mxu0 %v561
    %v977 = vpop.f32.mrf.mxu0
    %v978 = vadd.f32 %v865, %v977
    %979 = vdwg.mxu0
    %v980 = vmax.f32 %v885, 0.0
    %v981 = vmax.f32 %v888, 0.0
    %v982 = vmax.f32 %v891, 0.0
    %v983 = vmax.f32 %v894, 0.0
    %v984 = vmax.f32 %v897, 0.0
    %v985 = vmax.f32 %v900, 0.0
    %v986 = vmax.f32 %v903, 0.0
    %v987 = vmax.f32 %v906, 0.0
    %v988 = vmax.f32 %v909, 0.0
    %v989 = vmax.f32 %v912, 0.0
    %v990 = vmax.f32 %v915, 0.0
    %v991 = vmax.f32 %v918, 0.0
    %v992 = vmax.f32 %v921, 0.0
    %v993 = vmax.f32 %v924, 0.0
    %v994 = vmax.f32 %v927, 0.0
    %v995 = vmax.f32 %v930, 0.0
    %v996 = vmax.f32 %v933, 0.0
    %v997 = vmax.f32 %v936, 0.0
    %v998 = vmax.f32 %v939, 0.0
    %v999 = vmax.f32 %v942, 0.0
    %v1000 = vmax.f32 %v945, 0.0
    %v1001 = vmax.f32 %v948, 0.0
    %v1002 = vmax.f32 %v951, 0.0
    %v1003 = vmax.f32 %v954, 0.0
    %v1004 = vmax.f32 %v957, 0.0
    %v1005 = vmax.f32 %v960, 0.0
    %v1006 = vmax.f32 %v963, 0.0
    %v1007 = vmax.f32 %v966, 0.0
    %v1008 = vmax.f32 %v969, 0.0
    %v1009 = vmax.f32 %v972, 0.0
    %v1010 = vmax.f32 %v975, 0.0
    %v1011 = vmax.f32 %v978, 0.0
    %v1012 = vld [vmem:[%s5] sm:$0x3]
    %s1013 = sld [smem:[#allocation2]]
    %v1014 = vstv %s1013
    %v1016 = vperm.slane %v1012, 0
    %v1017 = vperm.slane %v1012, 1
    %1020 = vmatpush.msra.mxu0 %v995
    %1021 = vmatpush.msra.mxu0 %v994
    %1022 = vmatpush.msra.mxu0 %v993
    %1023 = vmatpush.msra.mxu0 %v992
    %1024 = vmatpush.msra.mxu0 %v991
    %1025 = vmatpush.msra.mxu0 %v990
    %1026 = vmatpush.msra.mxu0 %v989
    %1027 = vmatpush.msra.mxu0 %v988
    %1028 = vmatpush.msra.mxu0 %v987
    %1029 = vmatpush.msra.mxu0 %v986
    %1030 = vmatpush.msra.mxu0 %v985
    %1031 = vmatpush.msra.mxu0 %v984
    %1032 = vmatpush.msra.mxu0 %v983
    %1033 = vmatpush.msra.mxu0 %v982
    %1034 = vmatpush.msra.mxu0 %v981
    %1035 = vmatpush.msra.mxu0 %v980
    %1036 = vmatmul.f32.gmra.mxu0 %v1016
    %v1037 = vpop.f32.mrf.mxu0
    %v1038 = vadd.f32 %v1014, %v1037
    %1039 = vdwg.mxu0
    %1040 = vmatpush.msra.mxu0 %v1011
    %1041 = vmatpush.msra.mxu0 %v1010
    %1042 = vmatpush.msra.mxu0 %v1009
    %1043 = vmatpush.msra.mxu0 %v1008
    %1044 = vmatpush.msra.mxu0 %v1007
    %1045 = vmatpush.msra.mxu0 %v1006
    %1046 = vmatpush.msra.mxu0 %v1005
    %1047 = vmatpush.msra.mxu0 %v1004
    %1048 = vmatpush.msra.mxu0 %v1003
    %1049 = vmatpush.msra.mxu0 %v1002
    %1050 = vmatpush.msra.mxu0 %v1001
    %1051 = vmatpush.msra.mxu0 %v1000
    %1052 = vmatpush.msra.mxu0 %v999
    %1053 = vmatpush.msra.mxu0 %v998
    %1054 = vmatpush.msra.mxu0 %v997
    %1055 = vmatpush.msra.mxu0 %v996
    %1056 = vmatmul.f32.gmra.mxu0 %v1017
    %v1057 = vpop.f32.mrf.mxu0
    %v1058 = vadd.f32 %v1038, %v1057
    %1059 = vdwg.mxu0
    %1060 = vst [vmem:[#allocation3] sm:$0x1] %v1058
    // Predicated region
    $region30: #{tpu_custom_call.1} parent=1 // pred_check
      _
    $region31: #{tpu_custom_call.1} parent=1 // pred_check_branch
      %1062 = sbr.rel (0) target = $region33
    $region32: #{tpu_custom_call.1} parent=1 // pred_region
      %1064 = vsyncadd [#allocation4], 0
      %s1066 = sshll.u32 [#allocation3], 4
      %s1067 = int_to_ptr.vmem [resolvable:$true] %s1066
      %s1068 = sshll.u32 %s7, 4
      %s1069 = int_to_ptr.hbm [resolvable:$true] %s1068
      %1071 = dma.vmem_to_hbm [thread:$0]  %s1067, 16, %s1069, [#allocation4]
    $region33: #{tpu_custom_call.1} parent=1 // pred_fallthru
      _
    // Predicated region
    $region34: #{tpu_custom_call.1} parent=1 // pred_check
      _
    $region35: #{tpu_custom_call.1} parent=1 // pred_check_branch
      %1073 = sbr.rel (0) target = $region37
    $region36: #{tpu_custom_call.1} parent=1 // pred_region
      %1075 = dma.done [#allocation4], 16
    $region37: #{tpu_custom_call.1} parent=1 // pred_fallthru
      _
    %1076 = vsyncpa [#allocation4], 1

</llo_original>
